<compile_context>
chip_gen: v7x
topology: tpu7x:2x2x1
jax: 0.10.0
libtpu: 0.0.40
codegen_flags: <defaults>
</compile_context>

<pallas_src>
import functools

import jax
import jax.numpy as jnp
import numpy as np
from jax import lax
from jax.experimental import pallas as pl
from jax.experimental.pallas import tpu as pltpu


def _conv_bn_act_kernel(x_ref, w_ref, b_ref, o_ref, *,
                        Cin, Cout, K, H, W, B, has_residual):
    # x_ref: (B, Cin, H*W)    f32  unpadded activations (also the residual)
    # w_ref: (Cout, K*K*Cin)  bf16 conv weight with BN scale folded in;
    #                              column index = (kh*K + kw)*Cin + c
    # b_ref: (Cout, 1)        f32  folded BN bias
    # o_ref: (B, Cout, H*W)   f32  output (per-image NCHW, lane-dense 256-wide)
    HW = H * W
    pad = K // 2
    x = x_ref[...]                                            # (B, Cin, HW) f32

    # Column index of each output pixel (lane axis); used to mask horizontal
    # taps that would cross a row boundary of the flattened HxW image.
    col = lax.broadcasted_iota(jnp.int32, (1, 1, HW), 2) % W

    # In-VMEM im2col: for tap (kh, kw) the input pixel of output pixel i is
    # i + s with s = dh*W + dw.  A static shift via concat-with-zeros already
    # zeroes every vertically-out-of-range position; only the horizontal wrap
    # (w + dw outside [0, W)) needs an explicit mask.
    taps = []
    for kh in range(K):
        for kw in range(K):
            dh, dw = kh - pad, kw - pad
            s = dh * W + dw
            if s > 0:
                shifted = jnp.concatenate(
                    [x[:, :, s:], jnp.zeros((B, Cin, s), x.dtype)], axis=-1)
            elif s < 0:
                shifted = jnp.concatenate(
                    [jnp.zeros((B, Cin, -s), x.dtype), x[:, :, :s]], axis=-1)
            else:
                shifted = x
            if dw > 0:
                shifted = jnp.where(col < W - dw, shifted, 0.0)
            elif dw < 0:
                shifted = jnp.where(col >= -dw, shifted, 0.0)
            taps.append(shifted)

    # (B, K*K*Cin, HW); row order (kh*K + kw)*Cin + c matches w_ref's columns.
    patches = jnp.concatenate(taps, axis=1).astype(jnp.bfloat16)

    # One depth-KKC MXU matmul per image (256-lane wide), f32 accumulation,
    # then the f32 epilogue: folded BN bias + ReLU + exact f32 residual.
    for b in range(B):                                        # B is small/static
        acc = jnp.dot(w_ref[...], patches[b],
                      preferred_element_type=jnp.float32)     # (Cout, HW) f32
        y = jnp.maximum(acc + b_ref[...], 0.0)
        if has_residual:
            y = y + x[b]
        o_ref[b] = y.astype(o_ref.dtype)


def _pick_batch_tile(n, max_tile=64):
    # Batch as many images per grid step as possible (amortize per-step
    # overhead) while keeping >= 2 grid tiles so v7x's two TensorCores can both
    # be used, and capping the tile so VMEM stays comfortable.
    if n <= 1:
        return 1
    for b in range(min(n // 2, max_tile), 0, -1):
        if n % b == 0:
            return b
    return 1


def conv_bn_act_pallas(x_nchw, w_oihw, gamma, beta, mean, var, *,
                       eps=1e-5, kernel_size=3, stride=1, skip=True,
                       batch_tile=None):
    assert stride == 1, "fused kernel implements the stride=1 configuration"
    assert kernel_size % 2 == 1, "SAME padding via pad=K//2 assumes odd kernel"
    N, Cin, H, W = x_nchw.shape
    Cout = w_oihw.shape[0]
    K = kernel_size
    HW = H * W
    KKC = K * K * Cin
    has_residual = skip and stride == 1 and Cin == Cout

    # Fold eval-mode BatchNorm into the conv weight / bias.
    scale = gamma / jnp.sqrt(var + eps)                        # (Cout,)
    w_folded = w_oihw * scale.reshape(-1, 1, 1, 1)             # OIHW, f32
    bias = (beta - mean * scale).reshape(Cout, 1).astype(jnp.float32)
    # (Cout, Cin, K, K) -> (Cout, K, K, Cin) -> (Cout, K*K*Cin):
    # column index = (kh*K + kw)*Cin + c, matching the in-kernel tap order.
    w2d = jnp.transpose(w_folded, (0, 2, 3, 1)).reshape(Cout, KKC)
    w2d = w2d.astype(jnp.bfloat16)                             # MXU operand dtype

    # Activations go HBM -> VMEM exactly once, unpadded (free reshape of NCHW).
    x_flat = x_nchw.reshape(N, Cin, HW)

    B = _pick_batch_tile(N) if batch_tile is None else batch_tile
    assert N % B == 0, "batch tile must divide N"

    kernel = functools.partial(
        _conv_bn_act_kernel,
        Cin=Cin, Cout=Cout, K=K, H=H, W=W, B=B, has_residual=has_residual)

    out = pl.pallas_call(
        kernel,
        out_shape=jax.ShapeDtypeStruct((N, Cout, HW), x_nchw.dtype),
        grid_spec=pltpu.PrefetchScalarGridSpec(
            num_scalar_prefetch=0,
            grid=(N // B,),
            in_specs=[
                pl.BlockSpec((B, Cin, HW), lambda n: (n, 0, 0)),   # activations
                pl.BlockSpec((Cout, KKC), lambda n: (0, 0)),       # weight (resident)
                pl.BlockSpec((Cout, 1), lambda n: (0, 0)),         # bias (resident)
            ],
            out_specs=pl.BlockSpec((B, Cout, HW), lambda n: (n, 0, 0)),
        ),
        compiler_params=pltpu.CompilerParams(
            dimension_semantics=("parallel",)),
    )(x_flat, w2d, bias)

    # Output is already per-image NCHW; restore the spatial dims (free reshape).
    return out.reshape(N, Cout, H, W)


def _reference(x_nchw, w_oihw, gamma, beta, mean, var, eps, has_residual):
    # Pure-JAX reference with the same folded-BN params and bf16 MXU operands.
    scale = gamma / jnp.sqrt(var + eps)
    w_folded = (w_oihw * scale.reshape(-1, 1, 1, 1)).astype(jnp.bfloat16)
    bias = beta - mean * scale
    y = lax.conv_general_dilated(
        x_nchw.astype(jnp.bfloat16), w_folded, window_strides=(1, 1),
        padding="SAME", dimension_numbers=("NCHW", "OIHW", "NCHW"),
        preferred_element_type=jnp.float32)
    y = jnp.maximum(y + bias.reshape(1, -1, 1, 1), 0.0)
    if has_residual:
        y = y + x_nchw
    return y


if __name__ == "__main__":
    # Module hyper-parameters (skip requires in_chs == out_chs).
    in_chs, out_chs = 8, 8
    kernel_size, stride, skip = 3, 1, True
    eps = 1e-5
    has_residual = skip and stride == 1 and in_chs == out_chs   # True

    N, H, W = 4, 16, 16   # N=4 -> 2 grid tiles of B=2 images each
    key = jax.random.PRNGKey(0)
    kx, kw, kg, kb, km, kv = jax.random.split(key, 6)

    # Input / weights in PyTorch conventions (NCHW / OIHW).
    x = jax.random.normal(kx, (N, in_chs, H, W), jnp.float32)
    w = 0.1 * jax.random.normal(
        kw, (out_chs, in_chs, kernel_size, kernel_size), jnp.float32)
    # BatchNorm (eval-mode) parameters.
    gamma = 1.0 + 0.1 * jax.random.normal(kg, (out_chs,), jnp.float32)
    beta = 0.1 * jax.random.normal(kb, (out_chs,), jnp.float32)
    mean = 0.1 * jax.random.normal(km, (out_chs,), jnp.float32)
    var = jnp.abs(jax.random.normal(kv, (out_chs,), jnp.float32)) + 0.5

    out = conv_bn_act_pallas(x, w, gamma, beta, mean, var,
                             eps=eps, kernel_size=kernel_size,
                             stride=stride, skip=skip)
    out = jax.block_until_ready(out)
    assert out.shape == (N, out_chs, H, W)

    ref = _reference(x, w, gamma, beta, mean, var, eps, has_residual)
    np.testing.assert_allclose(np.asarray(out), np.asarray(ref),
                               rtol=5e-3, atol=5e-3)

    print("KERNEL_OK")
</pallas_src>

<mosaic_0001>
module attributes {stable_mosaic.version = 11 : i64} {
  func.func @_conv_bn_act_kernel(%arg0: i32, %arg1: memref<2x8x256xf32, #tpu.memory_space<vmem>>, %arg2: memref<8x72xbf16, #tpu.memory_space<vmem>>, %arg3: memref<8x1xf32, #tpu.memory_space<vmem>>, %arg4: memref<2x8x256xf32, #tpu.memory_space<vmem>>) attributes {dimension_semantics = [#tpu.dimension_semantics<parallel>], iteration_bounds = array<i64: 2>, scalar_prefetch = 0 : i64, scratch_operands = 0 : i64, tpu.core_type = #tpu.core_type<tc>, window_params = [{transform_indices = @transform_0, window_bounds = array<i64: 2, 8, 256>}, {pipeline_mode = #tpu.pipeline_mode<synchronous>, transform_indices = @transform_1, window_bounds = array<i64: 8, 72>}, {pipeline_mode = #tpu.pipeline_mode<synchronous>, transform_indices = @transform_2, window_bounds = array<i64: 8, 1>}, {transform_indices = @transform_3, window_bounds = array<i64: 2, 8, 256>}]} {
    %c0 = arith.constant 0 : index
    %c0_0 = arith.constant 0 : index
    %c0_1 = arith.constant 0 : index
    %0 = vector.load %arg1[%c0, %c0_0, %c0_1] : memref<2x8x256xf32, #tpu.memory_space<vmem>>, vector<2x8x256xf32>
    %1 = tpu.iota {dimensions = array<i32: 2>} : vector<1x1x256xi32>
    %c16_i32 = arith.constant 16 : i32
    %c0_i32 = arith.constant 0 : i32
    %2 = arith.cmpi eq, %c16_i32, %c0_i32 : i32
    %c1_i32 = arith.constant 1 : i32
    %3 = arith.select %2, %c1_i32, %c16_i32 : i32
    %4 = vector.broadcast %3 : i32 to vector<1x1x256xi32>
    %5 = arith.remsi %1, %4 : vector<1x1x256xi32>
    %c0_i32_2 = arith.constant 0 : i32
    %6 = vector.broadcast %c0_i32_2 : i32 to vector<1x1x256xi32>
    %7 = arith.cmpi ne, %5, %6 : vector<1x1x256xi32>
    %c0_i32_3 = arith.constant 0 : i32
    %8 = vector.broadcast %c0_i32_3 : i32 to vector<1x1x256xi32>
    %9 = arith.cmpi slt, %5, %8 : vector<1x1x256xi32>
    %c0_i32_4 = arith.constant 0 : i32
    %10 = arith.cmpi slt, %3, %c0_i32_4 : i32
    %11 = vector.broadcast %10 : i1 to vector<1x1x256xi1>
    %12 = vector.broadcast %11 : vector<1x1x256xi1> to vector<1x1x256xi1>
    %13 = arith.xori %9, %12 : vector<1x1x256xi1>
    %14 = arith.andi %13, %7 : vector<1x1x256xi1>
    %15 = vector.broadcast %3 : i32 to vector<1x1x256xi32>
    %16 = arith.addi %5, %15 : vector<1x1x256xi32>
    %17 = arith.select %14, %16, %5 : vector<1x1x256xi1>, vector<1x1x256xi32>
    %cst = arith.constant 0.000000e+00 : f32
    %18 = vector.broadcast %cst : f32 to vector<2x8x17xf32>
    %19 = vector.extract_strided_slice %0 {offsets = [0, 0, 0], sizes = [2, 8, 239], strides = [1, 1, 1]} : vector<2x8x256xf32> to vector<2x8x239xf32>
    %20 = tpu.concatenate %18, %19 in 2 : vector<2x8x17xf32>, vector<2x8x239xf32> -> vector<2x8x256xf32>
    %c1_i32_5 = arith.constant 1 : i32
    %21 = vector.broadcast %c1_i32_5 : i32 to vector<1x1x256xi32>
    %22 = arith.cmpi sge, %17, %21 : vector<1x1x256xi32>
    %cst_6 = arith.constant 0.000000e+00 : f32
    %23 = vector.shape_cast %22 : vector<1x1x256xi1> to vector<1x1x256xi1>
    %24 = vector.broadcast %23 : vector<1x1x256xi1> to vector<2x8x256xi1>
    %25 = vector.broadcast %cst_6 : f32 to vector<2x8x256xf32>
    %26 = arith.select %24, %20, %25 : vector<2x8x256xi1>, vector<2x8x256xf32>
    %cst_7 = arith.constant 0.000000e+00 : f32
    %27 = vector.broadcast %cst_7 : f32 to vector<2x8x16xf32>
    %28 = vector.extract_strided_slice %0 {offsets = [0, 0, 0], sizes = [2, 8, 240], strides = [1, 1, 1]} : vector<2x8x256xf32> to vector<2x8x240xf32>
    %29 = tpu.concatenate %27, %28 in 2 : vector<2x8x16xf32>, vector<2x8x240xf32> -> vector<2x8x256xf32>
    %cst_8 = arith.constant 0.000000e+00 : f32
    %30 = vector.broadcast %cst_8 : f32 to vector<2x8x15xf32>
    %31 = vector.extract_strided_slice %0 {offsets = [0, 0, 0], sizes = [2, 8, 241], strides = [1, 1, 1]} : vector<2x8x256xf32> to vector<2x8x241xf32>
    %32 = tpu.concatenate %30, %31 in 2 : vector<2x8x15xf32>, vector<2x8x241xf32> -> vector<2x8x256xf32>
    %c15_i32 = arith.constant 15 : i32
    %33 = vector.broadcast %c15_i32 : i32 to vector<1x1x256xi32>
    %34 = arith.cmpi slt, %17, %33 : vector<1x1x256xi32>
    %cst_9 = arith.constant 0.000000e+00 : f32
    %35 = vector.shape_cast %34 : vector<1x1x256xi1> to vector<1x1x256xi1>
    %36 = vector.broadcast %35 : vector<1x1x256xi1> to vector<2x8x256xi1>
    %37 = vector.broadcast %cst_9 : f32 to vector<2x8x256xf32>
    %38 = arith.select %36, %32, %37 : vector<2x8x256xi1>, vector<2x8x256xf32>
    %cst_10 = arith.constant 0.000000e+00 : f32
    %39 = vector.broadcast %cst_10 : f32 to vector<2x8x1xf32>
    %40 = vector.extract_strided_slice %0 {offsets = [0, 0, 0], sizes = [2, 8, 255], strides = [1, 1, 1]} : vector<2x8x256xf32> to vector<2x8x255xf32>
    %41 = tpu.concatenate %39, %40 in 2 : vector<2x8x1xf32>, vector<2x8x255xf32> -> vector<2x8x256xf32>
    %c1_i32_11 = arith.constant 1 : i32
    %42 = vector.broadcast %c1_i32_11 : i32 to vector<1x1x256xi32>
    %43 = arith.cmpi sge, %17, %42 : vector<1x1x256xi32>
    %cst_12 = arith.constant 0.000000e+00 : f32
    %44 = vector.shape_cast %43 : vector<1x1x256xi1> to vector<1x1x256xi1>
    %45 = vector.broadcast %44 : vector<1x1x256xi1> to vector<2x8x256xi1>
    %46 = vector.broadcast %cst_12 : f32 to vector<2x8x256xf32>
    %47 = arith.select %45, %41, %46 : vector<2x8x256xi1>, vector<2x8x256xf32>
    %48 = vector.extract_strided_slice %0 {offsets = [0, 0, 1], sizes = [2, 8, 255], strides = [1, 1, 1]} : vector<2x8x256xf32> to vector<2x8x255xf32>
    %cst_13 = arith.constant 0.000000e+00 : f32
    %49 = vector.broadcast %cst_13 : f32 to vector<2x8x1xf32>
    %50 = tpu.concatenate %48, %49 in 2 : vector<2x8x255xf32>, vector<2x8x1xf32> -> vector<2x8x256xf32>
    %c15_i32_14 = arith.constant 15 : i32
    %51 = vector.broadcast %c15_i32_14 : i32 to vector<1x1x256xi32>
    %52 = arith.cmpi slt, %17, %51 : vector<1x1x256xi32>
    %cst_15 = arith.constant 0.000000e+00 : f32
    %53 = vector.shape_cast %52 : vector<1x1x256xi1> to vector<1x1x256xi1>
    %54 = vector.broadcast %53 : vector<1x1x256xi1> to vector<2x8x256xi1>
    %55 = vector.broadcast %cst_15 : f32 to vector<2x8x256xf32>
    %56 = arith.select %54, %50, %55 : vector<2x8x256xi1>, vector<2x8x256xf32>
    %57 = vector.extract_strided_slice %0 {offsets = [0, 0, 15], sizes = [2, 8, 241], strides = [1, 1, 1]} : vector<2x8x256xf32> to vector<2x8x241xf32>
    %cst_16 = arith.constant 0.000000e+00 : f32
    %58 = vector.broadcast %cst_16 : f32 to vector<2x8x15xf32>
    %59 = tpu.concatenate %57, %58 in 2 : vector<2x8x241xf32>, vector<2x8x15xf32> -> vector<2x8x256xf32>
    %c1_i32_17 = arith.constant 1 : i32
    %60 = vector.broadcast %c1_i32_17 : i32 to vector<1x1x256xi32>
    %61 = arith.cmpi sge, %17, %60 : vector<1x1x256xi32>
    %cst_18 = arith.constant 0.000000e+00 : f32
    %62 = vector.shape_cast %61 : vector<1x1x256xi1> to vector<1x1x256xi1>
    %63 = vector.broadcast %62 : vector<1x1x256xi1> to vector<2x8x256xi1>
    %64 = vector.broadcast %cst_18 : f32 to vector<2x8x256xf32>
    %65 = arith.select %63, %59, %64 : vector<2x8x256xi1>, vector<2x8x256xf32>
    %66 = vector.extract_strided_slice %0 {offsets = [0, 0, 16], sizes = [2, 8, 240], strides = [1, 1, 1]} : vector<2x8x256xf32> to vector<2x8x240xf32>
    %cst_19 = arith.constant 0.000000e+00 : f32
    %67 = vector.broadcast %cst_19 : f32 to vector<2x8x16xf32>
    %68 = tpu.concatenate %66, %67 in 2 : vector<2x8x240xf32>, vector<2x8x16xf32> -> vector<2x8x256xf32>
    %69 = vector.extract_strided_slice %0 {offsets = [0, 0, 17], sizes = [2, 8, 239], strides = [1, 1, 1]} : vector<2x8x256xf32> to vector<2x8x239xf32>
    %cst_20 = arith.constant 0.000000e+00 : f32
    %70 = vector.broadcast %cst_20 : f32 to vector<2x8x17xf32>
    %71 = tpu.concatenate %69, %70 in 2 : vector<2x8x239xf32>, vector<2x8x17xf32> -> vector<2x8x256xf32>
    %c15_i32_21 = arith.constant 15 : i32
    %72 = vector.broadcast %c15_i32_21 : i32 to vector<1x1x256xi32>
    %73 = arith.cmpi slt, %17, %72 : vector<1x1x256xi32>
    %cst_22 = arith.constant 0.000000e+00 : f32
    %74 = vector.shape_cast %73 : vector<1x1x256xi1> to vector<1x1x256xi1>
    %75 = vector.broadcast %74 : vector<1x1x256xi1> to vector<2x8x256xi1>
    %76 = vector.broadcast %cst_22 : f32 to vector<2x8x256xf32>
    %77 = arith.select %75, %71, %76 : vector<2x8x256xi1>, vector<2x8x256xf32>
    %78 = tpu.concatenate %26, %29, %38, %47, %0, %56, %65, %68, %77 in 1 : vector<2x8x256xf32>, vector<2x8x256xf32>, vector<2x8x256xf32>, vector<2x8x256xf32>, vector<2x8x256xf32>, vector<2x8x256xf32>, vector<2x8x256xf32>, vector<2x8x256xf32>, vector<2x8x256xf32> -> vector<2x72x256xf32>
    %79 = arith.truncf %78 : vector<2x72x256xf32> to vector<2x72x256xbf16>
    %c0_23 = arith.constant 0 : index
    %c0_24 = arith.constant 0 : index
    %80 = vector.load %arg2[%c0_23, %c0_24] : memref<8x72xbf16, #tpu.memory_space<vmem>>, vector<8x72xbf16>
    %81 = vector.extract_strided_slice %79 {offsets = [0, 0, 0], sizes = [1, 72, 256], strides = [1, 1, 1]} : vector<2x72x256xbf16> to vector<1x72x256xbf16>
    %82 = vector.shape_cast %81 : vector<1x72x256xbf16> to vector<72x256xbf16>
    %cst_25 = arith.constant dense<0.000000e+00> : vector<8x256xf32>
    %83 = tpu.matmul %80, %82, %cst_25 {dimension_numbers = #tpu.dot_dimension_numbers<[1], [0], [0], [1], [0, 0, 1, 1], [], []>} : vector<8x72xbf16>, vector<72x256xbf16>, vector<8x256xf32> -> vector<8x256xf32>
    %c0_26 = arith.constant 0 : index
    %c0_27 = arith.constant 0 : index
    %84 = vector.load %arg3[%c0_26, %c0_27] : memref<8x1xf32, #tpu.memory_space<vmem>>, vector<8x1xf32>
    %85 = vector.broadcast %84 : vector<8x1xf32> to vector<8x256xf32>
    %86 = arith.addf %83, %85 : vector<8x256xf32>
    %cst_28 = arith.constant 0.000000e+00 : f32
    %87 = vector.broadcast %cst_28 : f32 to vector<8x256xf32>
    %88 = arith.maximumf %86, %87 : vector<8x256xf32>
    %89 = vector.extract_strided_slice %0 {offsets = [0, 0, 0], sizes = [1, 8, 256], strides = [1, 1, 1]} : vector<2x8x256xf32> to vector<1x8x256xf32>
    %90 = vector.shape_cast %89 : vector<1x8x256xf32> to vector<8x256xf32>
    %91 = arith.addf %88, %90 : vector<8x256xf32>
    %c0_29 = arith.constant 0 : index
    %c0_30 = arith.constant 0 : index
    %c0_31 = arith.constant 0 : index
    %92 = vector.load %arg4[%c0_29, %c0_30, %c0_31] : memref<2x8x256xf32, #tpu.memory_space<vmem>>, vector<1x8x256xf32>
    %93 = vector.shape_cast %92 : vector<1x8x256xf32> to vector<8x256xf32>
    %94 = vector.shape_cast %91 : vector<8x256xf32> to vector<1x8x256xf32>
    tpu.vector_store %arg4[%c0_29, %c0_30, %c0_31], %94 {strides = array<i32>} : memref<2x8x256xf32, #tpu.memory_space<vmem>>, vector<1x8x256xf32>,
    %c0_32 = arith.constant 0 : index
    %c0_33 = arith.constant 0 : index
    %95 = vector.load %arg2[%c0_32, %c0_33] : memref<8x72xbf16, #tpu.memory_space<vmem>>, vector<8x72xbf16>
    %96 = vector.extract_strided_slice %79 {offsets = [1, 0, 0], sizes = [1, 72, 256], strides = [1, 1, 1]} : vector<2x72x256xbf16> to vector<1x72x256xbf16>
    %97 = vector.shape_cast %96 : vector<1x72x256xbf16> to vector<72x256xbf16>
    %cst_34 = arith.constant dense<0.000000e+00> : vector<8x256xf32>
    %98 = tpu.matmul %95, %97, %cst_34 {dimension_numbers = #tpu.dot_dimension_numbers<[1], [0], [0], [1], [0, 0, 1, 1], [], []>} : vector<8x72xbf16>, vector<72x256xbf16>, vector<8x256xf32> -> vector<8x256xf32>
    %c0_35 = arith.constant 0 : index
    %c0_36 = arith.constant 0 : index
    %99 = vector.load %arg3[%c0_35, %c0_36] : memref<8x1xf32, #tpu.memory_space<vmem>>, vector<8x1xf32>
    %100 = vector.broadcast %99 : vector<8x1xf32> to vector<8x256xf32>
    %101 = arith.addf %98, %100 : vector<8x256xf32>
    %cst_37 = arith.constant 0.000000e+00 : f32
    %102 = vector.broadcast %cst_37 : f32 to vector<8x256xf32>
    %103 = arith.maximumf %101, %102 : vector<8x256xf32>
    %104 = vector.extract_strided_slice %0 {offsets = [1, 0, 0], sizes = [1, 8, 256], strides = [1, 1, 1]} : vector<2x8x256xf32> to vector<1x8x256xf32>
    %105 = vector.shape_cast %104 : vector<1x8x256xf32> to vector<8x256xf32>
    %106 = arith.addf %103, %105 : vector<8x256xf32>
    %c1 = arith.constant 1 : index
    %c0_38 = arith.constant 0 : index
    %c0_39 = arith.constant 0 : index
    %107 = vector.load %arg4[%c1, %c0_38, %c0_39] : memref<2x8x256xf32, #tpu.memory_space<vmem>>, vector<1x8x256xf32>
    %108 = vector.shape_cast %107 : vector<1x8x256xf32> to vector<8x256xf32>
    %109 = vector.shape_cast %106 : vector<8x256xf32> to vector<1x8x256xf32>
    tpu.vector_store %arg4[%c1, %c0_38, %c0_39], %109 {strides = array<i32>} : memref<2x8x256xf32, #tpu.memory_space<vmem>>, vector<1x8x256xf32>,
    return
  }
  func.func @transform_0(%arg0: i32) -> (i32, i32, i32) {
    %c0_i32 = arith.constant 0 : i32
    %c0_i32_0 = arith.constant 0 : i32
    %c0_i32_1 = arith.constant 0 : i32
    return %arg0, %c0_i32, %c0_i32_0 : i32, i32, i32
  }
  func.func @transform_1(%arg0: i32) -> (i32, i32) {
    %c0_i32 = arith.constant 0 : i32
    %c0_i32_0 = arith.constant 0 : i32
    %c0_i32_1 = arith.constant 0 : i32
    return %c0_i32, %c0_i32_0 : i32, i32
  }
  func.func @transform_2(%arg0: i32) -> (i32, i32) {
    %c0_i32 = arith.constant 0 : i32
    %c0_i32_0 = arith.constant 0 : i32
    %c0_i32_1 = arith.constant 0 : i32
    return %c0_i32, %c0_i32_0 : i32, i32
  }
  func.func @transform_3(%arg0: i32) -> (i32, i32, i32) {
    %c0_i32 = arith.constant 0 : i32
    %c0_i32_0 = arith.constant 0 : i32
    %c0_i32_1 = arith.constant 0 : i32
    return %arg0, %c0_i32, %c0_i32_0 : i32, i32, i32
  }
}

</mosaic_0001>

<llo_original>
// kernel: tpu_custom_call.1
$region0: #{tpu_custom_call.1}
  #allocation0 [shape = 'u32[]', space=smem, size = 0x4, offset = 0x4, fixed_abs, tag = 'smem constant byte address 0x4 - core index']
  #allocation1 [shape = 'u32[144,128]{1,0:T(1,128)}', space=vmem, size = 0x12000, scoped, tag = 'internal scratch']
  %s0 = inlined_call_operand.hbm [shape: f32[4,8,256], index: 0, kind: input, shape index: {}]
  %s1 = inlined_call_operand.vmem [shape: bf16[8,72], index: 1, kind: input, shape index: {}]
  %s2 = inlined_call_operand.vmem [shape: f32[8,1], index: 2, kind: input, shape index: {}]
  %s3 = inlined_call_operand.hbm [shape: f32[4,8,256], index: 3, kind: output, shape index: {}]
  %s4 = sld [smem:[#allocation0]]
  $region49: #{tpu_custom_call.1} parent=0
    _
  %s6 = ssub.s32 1, %s4
  %s7 = scalar_select 0, %s6, %s4
  $region1: #{tpu_custom_call.1} parent=0
    #allocation2 [shape = 'u8[32768]{0}', space=vmem, size = 0x8000, scoped, tag = 'input window, operand 0']
    #allocation3 [shape = 's32[2]{0}', space=sflag, size = 0x8, scoped, tag = 'scoped memory for tpu_custom_call.1']
    #allocation4 [shape = 's32[2]{0}', space=sflag, size = 0x8, scoped, tag = 'scoped memory for tpu_custom_call.1']
    #allocation5 [shape = 'u8[32768]{0}', space=vmem, size = 0x8000, scoped, tag = 'output window, operand 0']
    %8 = vsyncpa [#allocation3], 0
    %s9 = scalar_lea.sflag [#allocation3], 1
    %10 = vsyncpa %s9, 0
    %11 = vsyncpa [#allocation4], 0
    %s12 = scalar_lea.sflag [#allocation4], 1
    %13 = vsyncpa %s12, 0
    loop: start=0, step=1, limit=4
    $region2: #{tpu_custom_call.1} parent=1 // loop_pre_header
      _
    $region3: #{tpu_custom_call.1} parent=1 // loop_header
      %s15 = sphi 0, %s19
      %p16 = scmp.ge.s32.totalorder %s15, 4
      %s25 = sphi 0, %s27
      %s28 = sphi 0, %s25
      %s29 = sphi 0, %s28
      %s45 = sphi 0, %s29
      %s49 = sphi 0, %s49
      %s51 = sphi 0, %s49
      %s52 = sphi 0, %s51
      %s66 = sphi 0, %s52
      %s70 = sphi 0, %s70
      %s72 = sphi 0, %s70
      %s73 = sphi 0, %s72
      %s87 = sphi 0, %s73
      %s93 = sphi 0, %s95
      %s96 = sphi 0, %s93
      %s97 = sphi 0, %s96
      %s113 = sphi 0, %s97
    $region4: #{tpu_custom_call.1} parent=1 // loop_header_branch
      %18 = sbr.rel (%p16) target = $region8
    $region5: #{tpu_custom_call.1} parent=1 // loop_body
      %s20 = ssub.s32 %s15, 1
      %s21 = ssub.s32 %s15, 2
      %s22 = sadd.s32 %s15, 1
      %s23 = ssub.s32 %s15, %s22
      %p24 = scmp.eq.s32.totalorder %s23, 0
      %s26 = sadd.s32 %s25, 1
      %s27 = scalar_select %p24, %s25, %s26
      %p30 = pneg %p24
      %p31 = scmp.eq.s32.totalorder %s15, 1
      %p32 = por %p30, %p31
      %p33 = scmp.ne.s32.totalorder %s25, %s28
      %p34 = scmp.eq.s32.totalorder %s15, 0
      %p35 = por %p33, %p34
      %p36 = scmp.ne.s32.totalorder %s25, %s28
      %p37 = scmp.eq.s32.totalorder %s20, 1
      %p38 = por %p36, %p37
      %p39 = scmp.ne.s32.totalorder %s28, %s29
      %p40 = scmp.eq.s32.totalorder %s20, 0
      %p41 = por %p39, %p40
      %p42 = scmp.ne.s32.totalorder %s28, %s29
      %p43 = scmp.eq.s32.totalorder %s21, 1
      %p44 = por %p42, %p43
      %p46 = scmp.ne.s32.totalorder %s29, %s45
      %p47 = scmp.eq.s32.totalorder %s21, 0
      %p48 = por %p46, %p47
      %s50 = sadd.s32 %s49, 1
      %p53 = scmp.eq.s32.totalorder %s15, 1
      %p54 = scmp.ne.s32.totalorder %s49, %s51
      %p55 = scmp.eq.s32.totalorder %s15, 0
      %p56 = por %p54, %p55
      %p57 = scmp.ne.s32.totalorder %s49, %s51
      %p58 = scmp.eq.s32.totalorder %s20, 1
      %p59 = por %p57, %p58
      %p60 = scmp.ne.s32.totalorder %s51, %s52
      %p61 = scmp.eq.s32.totalorder %s20, 0
      %p62 = por %p60, %p61
      %p63 = scmp.ne.s32.totalorder %s51, %s52
      %p64 = scmp.eq.s32.totalorder %s21, 1
      %p65 = por %p63, %p64
      %p67 = scmp.ne.s32.totalorder %s52, %s66
      %p68 = scmp.eq.s32.totalorder %s21, 0
      %p69 = por %p67, %p68
      %s71 = sadd.s32 %s70, 1
      %p74 = scmp.eq.s32.totalorder %s15, 1
      %p75 = scmp.ne.s32.totalorder %s70, %s72
      %p76 = scmp.eq.s32.totalorder %s15, 0
      %p77 = por %p75, %p76
      %p78 = scmp.ne.s32.totalorder %s70, %s72
      %p79 = scmp.eq.s32.totalorder %s20, 1
      %p80 = por %p78, %p79
      %p81 = scmp.ne.s32.totalorder %s72, %s73
      %p82 = scmp.eq.s32.totalorder %s20, 0
      %p83 = por %p81, %p82
      %p84 = scmp.ne.s32.totalorder %s72, %s73
      %p85 = scmp.eq.s32.totalorder %s21, 1
      %p86 = por %p84, %p85
      %p88 = scmp.ne.s32.totalorder %s73, %s87
      %p89 = scmp.eq.s32.totalorder %s21, 0
      %p90 = por %p88, %p89
      %s91 = ssub.s32 %s15, %s22
      %p92 = scmp.eq.s32.totalorder %s91, 0
      %s94 = sadd.s32 %s93, 1
      %s95 = scalar_select %p92, %s93, %s94
      %p98 = pneg %p92
      %p99 = scmp.eq.s32.totalorder %s15, 1
      %p100 = por %p98, %p99
      %p101 = scmp.ne.s32.totalorder %s93, %s96
      %p102 = scmp.eq.s32.totalorder %s15, 0
      %p103 = por %p101, %p102
      %p104 = scmp.ne.s32.totalorder %s93, %s96
      %p105 = scmp.eq.s32.totalorder %s20, 1
      %p106 = por %p104, %p105
      %p107 = scmp.ne.s32.totalorder %s96, %s97
      %p108 = scmp.eq.s32.totalorder %s20, 0
      %p109 = por %p107, %p108
      %p110 = scmp.ne.s32.totalorder %s96, %s97
      %p111 = scmp.eq.s32.totalorder %s21, 1
      %p112 = por %p110, %p111
      %p114 = scmp.ne.s32.totalorder %s97, %s113
      %p115 = scmp.eq.s32.totalorder %s21, 0
      %p116 = por %p114, %p115
      %p117 = scmp.le.s32.totalorder 1, %s15
      %p118 = scmp.lt.s32.totalorder %s15, 3
      %p119 = pnand %p117, %p118
      %p120 = pneg %p119
      // Predicated region
      $region9: #{tpu_custom_call.1} parent=5 // pred_check
        _
      $region10: #{tpu_custom_call.1} parent=5 // pred_check_branch
        %122 = sbr.rel (%p119) target = $region12
      $region11: #{tpu_custom_call.1} parent=5 // pred_region
        %s123 = ssub.s32 %s15, 1
        // Predicated region
        $region13: #{tpu_custom_call.1} parent=11 // pred_check
          %p124 = pneg %p62
        $region14: #{tpu_custom_call.1} parent=11 // pred_check_branch
          %126 = sbr.rel (%p124) target = $region16
        $region15: #{tpu_custom_call.1} parent=11 // pred_region
          _
        $region16: #{tpu_custom_call.1} parent=11 // pred_fallthru
          _
        // Predicated region
        $region17: #{tpu_custom_call.1} parent=11 // pred_check
          %p127 = pneg %p83
        $region18: #{tpu_custom_call.1} parent=11 // pred_check_branch
          %129 = sbr.rel (%p127) target = $region20
        $region19: #{tpu_custom_call.1} parent=11 // pred_region
          _
        $region20: #{tpu_custom_call.1} parent=11 // pred_fallthru
          _
      $region12: #{tpu_custom_call.1} parent=5 // pred_fallthru
        _
      %p130 = scmp.lt.s32.totalorder %s15, 2
      // Predicated region
      $region21: #{tpu_custom_call.1} parent=5 // pred_check
        %p131 = pneg %p130
      $region22: #{tpu_custom_call.1} parent=5 // pred_check_branch
        %133 = sbr.rel (%p131) target = $region24
      $region23: #{tpu_custom_call.1} parent=5 // pred_region
        // Predicated region
        $region25: #{tpu_custom_call.1} parent=23 // pred_check
          %p134 = pneg %p35
        $region26: #{tpu_custom_call.1} parent=23 // pred_check_branch
          %136 = sbr.rel (%p134) target = $region28
        $region27: #{tpu_custom_call.1} parent=23 // pred_region
          %s137 = sand.u32 %s25, 1
          %s138 = scalar_lea.sflag [#allocation3], %s137
          %s139 = sand.u32 %s25, 1
          %s140 = smul.addr %s139, 32
          %s141 = scalar_lea.vmem [#allocation2], %s140
          %s142 = smul.u32 2, %s15
          %s144 = ssub.s32 512, 512
          %145 = vsyncadd %s138, %s144
          %s146 = smul.addr %s142, 2
          %s147 = smul.addr %s146, 128
          %s148 = scalar_lea.hbm %s0, %s147
          %s149 = sshll.u32 %s141, 4
          %s150 = int_to_ptr.vmem [resolvable:$true] %s149
          %155 = dma.hbm_to_vmem [thread:$0]  %s148, 512, %s150, %s138, 256, 256, 16
        $region28: #{tpu_custom_call.1} parent=23 // pred_fallthru
          _
      $region24: #{tpu_custom_call.1} parent=5 // pred_fallthru
        _
      %p156 = scmp.le.s32.totalorder 1, %s15
      %p157 = scmp.lt.s32.totalorder %s15, 3
      %p158 = pnand %p156, %p157
      %p159 = pneg %p158
      // Predicated region
      $region29: #{tpu_custom_call.1} parent=5 // pred_check
        _
      $region30: #{tpu_custom_call.1} parent=5 // pred_check_branch
        %161 = sbr.rel (%p158) target = $region32
      $region31: #{tpu_custom_call.1} parent=5 // pred_region
        %s162 = ssub.s32 %s15, 1
        %s163 = sand.u32 %s28, 1
        %s164 = scalar_lea.sflag [#allocation3], %s163
        %s165 = sand.u32 %s28, 1
        %s166 = smul.addr %s165, 32
        %s167 = scalar_lea.vmem [#allocation2], %s166
        // Predicated region
        $region33: #{tpu_custom_call.1} parent=31 // pred_check
          %p168 = pneg %p41
        $region34: #{tpu_custom_call.1} parent=31 // pred_check_branch
          %170 = sbr.rel (%p168) target = $region36
        $region35: #{tpu_custom_call.1} parent=31 // pred_region
          %171 = dma.done %s164, 512
        $region36: #{tpu_custom_call.1} parent=31 // pred_fallthru
          _
        %s172 = sand.u32 %s28, 1
        %s173 = scalar_lea.sflag [#allocation3], %s172
        %s174 = sand.u32 %s28, 1
        %s175 = smul.addr %s174, 32
        %s176 = scalar_lea.vmem [#allocation2], %s175
        %p177 = pneg %p41
        %p178 = pneg %p38
        %p179 = pneg %p62
        %p180 = pneg %p59
        %p181 = pneg %p83
        %p182 = pneg %p80
        %p183 = pneg %p109
        %p184 = pneg %p106
        %s185 = sand.u32 %s96, 1
        %s186 = scalar_lea.sflag [#allocation4], %s185
        %s187 = sand.u32 %s96, 1
        %s188 = smul.addr %s187, 32
        %s189 = scalar_lea.vmem [#allocation5], %s188
        %s190 = smul.u32 2, %s20
        %s191 = smul.u32 2, %s20
        %v193 = vld [vmem:[%s167] sm:$0xff]
        %v194 = vld [vmem:[%s167 + $0x8] sm:$0xff]
        %v195 = vld [vmem:[%s167 + $0x10] sm:$0xff]
        %v196 = vld [vmem:[%s167 + $0x18] sm:$0xff]
        %v197 = vlaneseq
        %v198 = vand.u32 %v197, 127
        %v199 = vadd.s32 %v198, 128
        %vm200 = vcmp.lt.s32.totalorder %v198, 0
        %v201 = vsub.s32 0, %v198
        %v202 = vsel %vm200, %v201, %v198
        %v203 = vshrl.u32 %v202, 4
        %v204 = vand.u32 %v202, 15
        %v205 = vsub.s32 0, %v204
        %v206 = vsel %vm200, %v205, %v204
        %vm207 = vcmp.lt.s32.totalorder %v199, 0
        %v208 = vsub.s32 0, %v199
        %v209 = vsel %vm207, %v208, %v199
        %v210 = vshrl.u32 %v209, 4
        %v211 = vand.u32 %v209, 15
        %v212 = vsub.s32 0, %v211
        %v213 = vsel %vm207, %v212, %v211
        %vm214 = vcmp.ne.s32.totalorder %v206, 0
        %vm215 = vcmp.ne.s32.totalorder %v213, 0
        %vm216 = vcmp.lt.s32.totalorder %v206, 0
        %vm217 = vcmp.lt.s32.totalorder %v213, 0
        %vm218 = vmand %vm216, %vm214
        %vm219 = vmand %vm217, %vm215
        %v220 = vadd.s32 %v206, 16
        %v221 = vadd.s32 %v213, 16
        %v222 = vsel %vm218, %v220, %v206
        %v223 = vsel %vm219, %v221, %v213
        %228 = vrot.lane.b32.xlu0 %v193, 17
        %v229 = vpop.permute.xlu0 %228
        %230 = vrot.lane.b32.xlu0 %v194, 17
        %v231 = vpop.permute.xlu0 %230
        %232 = vrot.lane.b32.xlu0 %v195, 17
        %v233 = vpop.permute.xlu0 %232
        %234 = vrot.lane.b32.xlu0 %v196, 17
        %v235 = vpop.permute.xlu0 %234
        %vm236 = vcmask 138240
        %v237 = vsel %vm236, %v229, %v231
        %v238 = vsel %vm236, %v233, %v235
        %v243 = vsel %vm236, 0.0, %v229
        %v244 = vsel %vm236, 0.0, %v233
        %vm245 = vcmp.ge.s32.totalorder %v222, 1
        %vm246 = vcmp.ge.s32.totalorder %v223, 1
        %v247 = vsel %vm245, 1, 0
        %v248 = vsel %vm246, 1, 0
        %vm249 = vcmp.eq.s32.totalorder %v247, 1
        %vm250 = vcmp.eq.s32.totalorder %v248, 1
        %v251 = vsel %vm249, %v243, 0.0
        %v252 = vsel %vm250, %v237, 0.0
        %v253 = vsel %vm249, %v244, 0.0
        %v254 = vsel %vm250, %v238, 0.0
        %255 = vrot.lane.b32.xlu0 %v193, 16
        %v256 = vpop.permute.xlu0 %255
        %257 = vrot.lane.b32.xlu0 %v194, 16
        %v258 = vpop.permute.xlu0 %257
        %259 = vrot.lane.b32.xlu0 %v195, 16
        %v260 = vpop.permute.xlu0 %259
        %261 = vrot.lane.b32.xlu0 %v196, 16
        %v262 = vpop.permute.xlu0 %261
        %vm263 = vcmask 130048
        %v264 = vsel %vm263, %v256, %v258
        %v265 = vsel %vm263, %v260, %v262
        %v270 = vsel %vm263, 0.0, %v256
        %v271 = vsel %vm263, 0.0, %v260
        %272 = vrot.lane.b32.xlu0 %v193, 15
        %v273 = vpop.permute.xlu0 %272
        %274 = vrot.lane.b32.xlu0 %v194, 15
        %v275 = vpop.permute.xlu0 %274
        %276 = vrot.lane.b32.xlu0 %v195, 15
        %v277 = vpop.permute.xlu0 %276
        %278 = vrot.lane.b32.xlu0 %v196, 15
        %v279 = vpop.permute.xlu0 %278
        %vm280 = vcmask 121856
        %v281 = vsel %vm280, %v273, %v275
        %v282 = vsel %vm280, %v277, %v279
        %v287 = vsel %vm280, 0.0, %v273
        %v288 = vsel %vm280, 0.0, %v277
        %vm289 = vcmp.lt.s32.totalorder %v222, 15
        %vm290 = vcmp.lt.s32.totalorder %v223, 15
        %v291 = vsel %vm289, 1, 0
        %v292 = vsel %vm290, 1, 0
        %vm293 = vcmp.eq.s32.totalorder %v291, 1
        %vm294 = vcmp.eq.s32.totalorder %v292, 1
        %v295 = vsel %vm293, %v287, 0.0
        %v296 = vsel %vm294, %v281, 0.0
        %v297 = vsel %vm293, %v288, 0.0
        %v298 = vsel %vm294, %v282, 0.0
        %299 = vrot.lane.b32.xlu0 %v193, 1
        %v300 = vpop.permute.xlu0 %299
        %301 = vrot.lane.b32.xlu0 %v194, 1
        %v302 = vpop.permute.xlu0 %301
        %303 = vrot.lane.b32.xlu0 %v195, 1
        %v304 = vpop.permute.xlu0 %303
        %305 = vrot.lane.b32.xlu0 %v196, 1
        %v306 = vpop.permute.xlu0 %305
        %vm307 = vcmask 7168
        %v308 = vsel %vm307, %v300, %v302
        %v309 = vsel %vm307, %v304, %v306
        %v314 = vsel %vm307, 0.0, %v300
        %v315 = vsel %vm307, 0.0, %v304
        %v316 = vsel %vm249, %v314, 0.0
        %v317 = vsel %vm250, %v308, 0.0
        %v318 = vsel %vm249, %v315, 0.0
        %v319 = vsel %vm250, %v309, 0.0
        %320 = vrot.lane.b32.xlu0 %v193, 127
        %v321 = vpop.permute.xlu0 %320
        %322 = vrot.lane.b32.xlu0 %v194, 127
        %v323 = vpop.permute.xlu0 %322
        %324 = vrot.lane.b32.xlu0 %v195, 127
        %v325 = vpop.permute.xlu0 %324
        %326 = vrot.lane.b32.xlu0 %v196, 127
        %v327 = vpop.permute.xlu0 %326
        %vm328 = vcmask 1039360
        %v329 = vsel %vm328, %v321, %v323
        %v330 = vsel %vm328, %v325, %v327
        %v335 = vsel %vm328, %v323, 0.0
        %v336 = vsel %vm328, %v327, 0.0
        %v337 = vsel %vm293, %v329, 0.0
        %v338 = vsel %vm294, %v335, 0.0
        %v339 = vsel %vm293, %v330, 0.0
        %v340 = vsel %vm294, %v336, 0.0
        %341 = vrot.lane.b32.xlu0 %v193, 113
        %v342 = vpop.permute.xlu0 %341
        %343 = vrot.lane.b32.xlu0 %v194, 113
        %v344 = vpop.permute.xlu0 %343
        %345 = vrot.lane.b32.xlu0 %v195, 113
        %v346 = vpop.permute.xlu0 %345
        %347 = vrot.lane.b32.xlu0 %v196, 113
        %v348 = vpop.permute.xlu0 %347
        %vm349 = vcmask 924672
        %v350 = vsel %vm349, %v342, %v344
        %v351 = vsel %vm349, %v346, %v348
        %v356 = vsel %vm349, %v344, 0.0
        %v357 = vsel %vm349, %v348, 0.0
        %v358 = vsel %vm249, %v350, 0.0
        %v359 = vsel %vm250, %v356, 0.0
        %v360 = vsel %vm249, %v351, 0.0
        %v361 = vsel %vm250, %v357, 0.0
        %362 = vrot.lane.b32.xlu0 %v193, 112
        %v363 = vpop.permute.xlu0 %362
        %364 = vrot.lane.b32.xlu0 %v194, 112
        %v365 = vpop.permute.xlu0 %364
        %366 = vrot.lane.b32.xlu0 %v195, 112
        %v367 = vpop.permute.xlu0 %366
        %368 = vrot.lane.b32.xlu0 %v196, 112
        %v369 = vpop.permute.xlu0 %368
        %vm370 = vcmask 916480
        %v371 = vsel %vm370, %v363, %v365
        %v372 = vsel %vm370, %v367, %v369
        %v377 = vsel %vm370, %v365, 0.0
        %v378 = vsel %vm370, %v369, 0.0
        %379 = vrot.lane.b32.xlu0 %v193, 111
        %v380 = vpop.permute.xlu0 %379
        %381 = vrot.lane.b32.xlu0 %v194, 111
        %v382 = vpop.permute.xlu0 %381
        %383 = vrot.lane.b32.xlu0 %v195, 111
        %v384 = vpop.permute.xlu0 %383
        %385 = vrot.lane.b32.xlu0 %v196, 111
        %v386 = vpop.permute.xlu0 %385
        %vm387 = vcmask 908288
        %v388 = vsel %vm387, %v380, %v382
        %v389 = vsel %vm387, %v384, %v386
        %v394 = vsel %vm387, %v382, 0.0
        %v395 = vsel %vm387, %v386, 0.0
        %v396 = vsel %vm293, %v388, 0.0
        %v397 = vsel %vm294, %v394, 0.0
        %v398 = vsel %vm293, %v389, 0.0
        %v399 = vsel %vm294, %v395, 0.0
        %v400 = vpack.c.bf16 %v270, %v251
        %v401 = vpack.c.bf16 %v264, %v252
        %v402 = vpack.c.bf16 %v316, %v295
        %v403 = vpack.c.bf16 %v317, %v296
        %v404 = vpack.c.bf16 %v337, %v193
        %v405 = vpack.c.bf16 %v338, %v194
        %v406 = vpack.c.bf16 %v371, %v358
        %v407 = vpack.c.bf16 %v377, %v359
        %v408 = vpack.c.bf16 %v396, %v396
        %v409 = vpack.c.bf16 %v397, %v397
        %v410 = vpack.c.bf16 %v271, %v253
        %v411 = vpack.c.bf16 %v265, %v254
        %v412 = vpack.c.bf16 %v318, %v297
        %v413 = vpack.c.bf16 %v319, %v298
        %v414 = vpack.c.bf16 %v339, %v195
        %v415 = vpack.c.bf16 %v340, %v196
        %v416 = vpack.c.bf16 %v372, %v360
        %v417 = vpack.c.bf16 %v378, %v361
        %v418 = vpack.c.bf16 %v398, %v398
        %v419 = vpack.c.bf16 %v399, %v399
        %v420 = vld [vmem:[%s1] sm:$0xf]
        %v421 = vld [vmem:[%s2] sm:$0xff]
        %423 = vset.pattern.permute.xlu0 0
        %424 = vperm.xlu0 %423, %v421
        %v425 = vpop.permute.xlu0 %424
        %vm427 = vcmask 588800
        %v429 = vsel %vm427, %v420, 0
        %vm431 = vcmask 1043456
        %v433 = vsel %vm431, %v408, 0
        %v436 = vsel %vm431, %v409, 0
        %438 = vmatprep.subr.bf16.mxu0 %v401
        %439 = vmatpush1.bf16.msra.mxu0 %v400
        %440 = vmatprep.subr.bf16.mxu0 %v403
        %441 = vmatpush1.bf16.msra.mxu0 %v402
        %442 = vmatprep.subr.bf16.mxu0 %v405
        %443 = vmatpush1.bf16.msra.mxu0 %v404
        %444 = vmatprep.subr.bf16.mxu0 %v407
        %445 = vmatpush1.bf16.msra.mxu0 %v406
        %446 = vmatprep.subr.bf16.mxu0 %v436
        %447 = vmatpush1.bf16.msra.mxu0 %v433
        %448 = vmatprep.subr.bf16.mxu0 0
        %449 = vmatpush1.bf16.msra.mxu0 0
        %450 = vmatprep.subr.bf16.mxu0 0
        %451 = vmatpush1.bf16.msra.mxu0 0
        %452 = vmatprep.subr.bf16.mxu0 0
        %453 = vmatpush1.bf16.msra.mxu0 0
        %454 = vmatprep.subr.bf16.mxu0 0
        %455 = vmatpush1.bf16.msra.mxu0 0
        %456 = vmatprep.subr.bf16.mxu0 0
        %457 = vmatpush1.bf16.msra.mxu0 0
        %458 = vmatprep.subr.bf16.mxu0 0
        %459 = vmatpush1.bf16.msra.mxu0 0
        %460 = vmatprep.subr.bf16.mxu0 0
        %461 = vmatpush1.bf16.msra.mxu0 0
        %462 = vmatprep.subr.bf16.mxu0 0
        %463 = vmatpush1.bf16.msra.mxu0 0
        %464 = vmatprep.subr.bf16.mxu0 0
        %465 = vmatpush1.bf16.msra.mxu0 0
        %466 = vmatprep.subr.bf16.mxu0 0
        %467 = vmatpush1.bf16.msra.mxu0 0
        %468 = vmatprep.subr.bf16.mxu0 0
        %469 = vmatpush1.bf16.msra.mxu0 0
        %470 = vmatprep.mubr.bf16.mxu0 0
        %471 = vmatmul.mubr.bf16.gmra.mrb[0].mxu0 %v429
        %v472 = vpop.f32.mrb[0].mxu0
        %v473 = vadd.f32 %v425, %v472
        %v474 = vpop.f32.mrb[0].mxu0
        %v475 = vadd.f32 %v425, %v474
        %v476 = vpop.f32.mrb[0].mxu0
        %v477 = vpop.f32.mrb[0].mxu0
        %478 = vdwg.mxu0
        %v479 = vmax.f32 %v473, 0.0
        %v480 = vmax.f32 %v475, 0.0
        %v481 = vadd.f32 %v479, %v193
        %v482 = vadd.f32 %v480, %v194
        %483 = vst [vmem:[%s189] sm:$0xff] %v481
        %484 = vst [vmem:[%s189 + $0x8] sm:$0xff] %v482
        %v485 = vld [vmem:[%s1] sm:$0xf]
        %v486 = vld [vmem:[%s2] sm:$0xff]
        %488 = vset.pattern.permute.xlu0 0
        %489 = vperm.xlu0 %488, %v486
        %v490 = vpop.permute.xlu0 %489
        %v493 = vsel %vm427, %v485, 0
        %v496 = vsel %vm431, %v418, 0
        %v499 = vsel %vm431, %v419, 0
        %501 = vmatprep.subr.bf16.mxu0 %v411
        %502 = vmatpush1.bf16.msra.mxu0 %v410
        %503 = vmatprep.subr.bf16.mxu0 %v413
        %504 = vmatpush1.bf16.msra.mxu0 %v412
        %505 = vmatprep.subr.bf16.mxu0 %v415
        %506 = vmatpush1.bf16.msra.mxu0 %v414
        %507 = vmatprep.subr.bf16.mxu0 %v417
        %508 = vmatpush1.bf16.msra.mxu0 %v416
        %509 = vmatprep.subr.bf16.mxu0 %v499
        %510 = vmatpush1.bf16.msra.mxu0 %v496
        %511 = vmatprep.subr.bf16.mxu0 0
        %512 = vmatpush1.bf16.msra.mxu0 0
        %513 = vmatprep.subr.bf16.mxu0 0
        %514 = vmatpush1.bf16.msra.mxu0 0
        %515 = vmatprep.subr.bf16.mxu0 0
        %516 = vmatpush1.bf16.msra.mxu0 0
        %517 = vmatprep.subr.bf16.mxu0 0
        %518 = vmatpush1.bf16.msra.mxu0 0
        %519 = vmatprep.subr.bf16.mxu0 0
        %520 = vmatpush1.bf16.msra.mxu0 0
        %521 = vmatprep.subr.bf16.mxu0 0
        %522 = vmatpush1.bf16.msra.mxu0 0
        %523 = vmatprep.subr.bf16.mxu0 0
        %524 = vmatpush1.bf16.msra.mxu0 0
        %525 = vmatprep.subr.bf16.mxu0 0
        %526 = vmatpush1.bf16.msra.mxu0 0
        %527 = vmatprep.subr.bf16.mxu0 0
        %528 = vmatpush1.bf16.msra.mxu0 0
        %529 = vmatprep.subr.bf16.mxu0 0
        %530 = vmatpush1.bf16.msra.mxu0 0
        %531 = vmatprep.subr.bf16.mxu0 0
        %532 = vmatpush1.bf16.msra.mxu0 0
        %533 = vmatprep.mubr.bf16.mxu0 0
        %534 = vmatmul.mubr.bf16.gmra.mrb[0].mxu0 %v493
        %v535 = vpop.f32.mrb[0].mxu0
        %v536 = vadd.f32 %v490, %v535
        %v537 = vpop.f32.mrb[0].mxu0
        %v538 = vadd.f32 %v490, %v537
        %v539 = vpop.f32.mrb[0].mxu0
        %v540 = vpop.f32.mrb[0].mxu0
        %541 = vdwg.mxu0
        %v542 = vmax.f32 %v536, 0.0
        %v543 = vmax.f32 %v538, 0.0
        %v544 = vadd.f32 %v542, %v195
        %v545 = vadd.f32 %v543, %v196
        %s546 = scalar_lea.vmem %s189, 16 [#allocation5]
        %547 = vst [vmem:[%s546] sm:$0xff] %v544
        %548 = vst [vmem:[%s546 + $0x8] sm:$0xff] %v545
        %s549 = sand.u32 %s96, 1
        %s550 = scalar_lea.sflag [#allocation4], %s549
        %s551 = sand.u32 %s96, 1
        %s552 = smul.addr %s551, 32
        %s553 = scalar_lea.vmem [#allocation5], %s552
        // Predicated region
        $region37: #{tpu_custom_call.1} parent=31 // pred_check
          %p554 = pneg %p106
        $region38: #{tpu_custom_call.1} parent=31 // pred_check_branch
          %556 = sbr.rel (%p554) target = $region40
        $region39: #{tpu_custom_call.1} parent=31 // pred_region
          %s557 = smul.u32 2, %s20
          %s559 = ssub.s32 512, 512
          %560 = vsyncadd %s550, %s559
          %s561 = smul.addr %s557, 2
          %s562 = smul.addr %s561, 128
          %s563 = scalar_lea.hbm %s3, %s562
          %s564 = sshll.u32 %s553, 4
          %s565 = int_to_ptr.vmem [resolvable:$true] %s564
          %570 = dma.vmem_to_hbm [thread:$0]  %s565, 512, %s563, %s550, 256, 256, 16
        $region40: #{tpu_custom_call.1} parent=31 // pred_fallthru
          _
      $region32: #{tpu_custom_call.1} parent=5 // pred_fallthru
        _
      %p571 = scmp.le.s32.totalorder 2, %s15
      // Predicated region
      $region41: #{tpu_custom_call.1} parent=5 // pred_check
        %p572 = pneg %p571
      $region42: #{tpu_custom_call.1} parent=5 // pred_check_branch
        %574 = sbr.rel (%p572) target = $region44
      $region43: #{tpu_custom_call.1} parent=5 // pred_region
        %s575 = ssub.s32 %s15, 2
        // Predicated region
        $region45: #{tpu_custom_call.1} parent=43 // pred_check
          %p576 = pneg %p112
        $region46: #{tpu_custom_call.1} parent=43 // pred_check_branch
          %578 = sbr.rel (%p576) target = $region48
        $region47: #{tpu_custom_call.1} parent=43 // pred_region
          %s579 = sand.u32 %s97, 1
          %s580 = scalar_lea.sflag [#allocation4], %s579
          %s581 = sand.u32 %s97, 1
          %s582 = smul.addr %s581, 32
          %s583 = scalar_lea.vmem [#allocation5], %s582
          %584 = dma.done %s580, 512
        $region48: #{tpu_custom_call.1} parent=43 // pred_fallthru
          _
      $region44: #{tpu_custom_call.1} parent=5 // pred_fallthru
        _
    $region6: #{tpu_custom_call.1} parent=1 // loop_footer
      %s19 = sadd.s32 1, %s15
    $region7: #{tpu_custom_call.1} parent=1 // loop_footer_branch
      %14 = sbr.rel target = $region3
    $region8: #{tpu_custom_call.1} parent=1 // loop_exit
      _
    %585 = vsyncpa [#allocation3], 1
    %s586 = scalar_lea.sflag [#allocation3], 1
    %587 = vsyncpa %s586, 1
    %588 = vsyncpa [#allocation4], 1
    %s589 = scalar_lea.sflag [#allocation4], 1
    %590 = vsyncpa %s589, 1

</llo_original>
